<compile_context>
chip_gen: v5e
topology: v5e:2x2
jax: 0.10.0
libtpu: 0.0.40
codegen_flags: <defaults>
</compile_context>

<pallas_src>
import functools

import jax
import jax.numpy as jnp
from jax.experimental import pallas as pl
from jax.experimental.pallas import tpu as pltpu

LANE = 128      # lane width of a vreg (last dim)
SUBLANE = 8     # sublane count of a vreg (second-last dim)


def _round_up(n, m):
    return ((n + m - 1) // m) * m


# --------------------------------------------------------------------------- #
# Kernel
# --------------------------------------------------------------------------- #
def _fused_mlp_kernel(*refs, num_layers):
    """Whole MLP in one kernel.

    refs = (x_ref, w_0 ... w_{L-1}, b_0 ... b_{L-1}, o_ref)
      x_ref : (Bt, Kp_0)      f32 padded input activation tile
      w_l   : (Kp_l, Np_l)    bf16 zero-padded weight (in, out), Kp_l == Np_{l-1}
      b_l   : (1,   Np_l)     f32 zero-padded bias
      o_ref : (Bt, Np_{L-1})  padded output tile
    """
    x_ref = refs[0]
    w_refs = refs[1:1 + num_layers]
    b_refs = refs[1 + num_layers:1 + 2 * num_layers]
    o_ref = refs[1 + 2 * num_layers]

    act = x_ref[...].astype(jnp.float32)
    # Static unroll keeps the whole chain visible to the scheduler (overlaps
    # the VPU epilogue of layer l with the MXU push of layer l+1).
    for l in range(num_layers):
        w = w_refs[l][...]  # bf16
        # MXU: bf16 x bf16 -> f32 accumulate (native path on v5e/v6e/v7x).
        y = jnp.dot(act.astype(w.dtype), w, preferred_element_type=jnp.float32)
        y = y + b_refs[l][...]              # f32 bias add on the VPU
        if l != num_layers - 1:             # last nn.Linear has no activation
            y = jnp.maximum(y, 0.0)
        act = y
    o_ref[...] = act.astype(o_ref.dtype)


# --------------------------------------------------------------------------- #
# Host-side helpers
# --------------------------------------------------------------------------- #
def pack_generator_params(params, weight_dtype=jnp.bfloat16,
                          bias_dtype=jnp.float32):
    """Pad/cast each layer's (W, b) to 128-lane-aligned shapes.

    Call ONCE (outside the jit'ed forward) so padded weights are not
    re-materialized in HBM on every call.  W is (in_features, out_features).
    """
    packed = []
    for W, b in params:
        k_in, k_out = W.shape
        Kp, Np = _round_up(k_in, LANE), _round_up(k_out, LANE)
        Wp = jnp.pad(W, ((0, Kp - k_in), (0, Np - k_out))).astype(weight_dtype)
        bp = jnp.pad(b.reshape(1, -1), ((0, 0), (0, Np - k_out))).astype(bias_dtype)
        packed.append((Wp, bp))
    return packed


def _vmem_limit_bytes(est_bytes):
    # 1.5x headroom over the static estimate; floor at the 32 MiB default,
    # ceiling well below v5e/v6e physical VMEM (128 MiB).  Realistic generator
    # sizes stay far below v7x's 64 MiB physical VMEM with bf16 weights.
    return int(min(max(est_bytes * 3 // 2, 32 << 20), 100 << 20))


def _pick_batch_tile(max_width, param_bytes, budget=48 << 20):
    """Derive batch_tile from a VMEM budget (v7x: 64 MiB physical)."""
    # Per batch row: double-buffered in/out tiles + ~3 f32 intermediates.
    per_row = max_width * 4 * 6
    avail = max(budget - param_bytes, 8 << 20)
    bt = (avail // per_row) // SUBLANE * SUBLANE
    return int(max(SUBLANE, min(1024, bt)))


# --------------------------------------------------------------------------- #
# Forward pass
# --------------------------------------------------------------------------- #
def generator_forward(params_padded, z, *, out_size, batch_tile=None):
    """Generator.forward(z): fused MLP, one pallas_call for the whole network.

    params_padded: output of pack_generator_params (per-layer padded W/b).
    out_size:      true (unpadded) output feature count (static).
    """
    B, in_size = z.shape
    num_layers = len(params_padded)
    dtype = z.dtype

    weights = [w for w, _ in params_padded]
    biases = [b for _, b in params_padded]
    Kp0 = weights[0].shape[0]
    Np_last = weights[-1].shape[1]

    Bp = _round_up(max(B, SUBLANE), SUBLANE)
    x_pad = jnp.pad(z, ((0, Bp - B), (0, Kp0 - in_size)))

    param_bytes = sum(a.size * a.dtype.itemsize for a in weights + biases)
    max_width = max([Kp0] + [w.shape[1] for w in weights])
    if batch_tile is None:
        batch_tile = _pick_batch_tile(max_width, param_bytes)

    kernel = functools.partial(_fused_mlp_kernel, num_layers=num_layers)
    n_in = 1 + 2 * num_layers

    if Bp < 16:
        # Tiny batch (demo shapes): single ungridded invocation, everything in
        # VMEM.  Splitting across TCs is not worth it below 16 rows.
        est = (param_bytes
               + Bp * Kp0 * x_pad.dtype.itemsize
               + Bp * Np_last * dtype.itemsize
               + Bp * max_width * 4 * 3)
        out_pad = pl.pallas_call(
            kernel,
            out_shape=jax.ShapeDtypeStruct((Bp, Np_last), dtype),
            in_specs=[pl.BlockSpec(memory_space=pltpu.MemorySpace.VMEM)] * n_in,
            out_specs=pl.BlockSpec(memory_space=pltpu.MemorySpace.VMEM),
            compiler_params=pltpu.CompilerParams(
                vmem_limit_bytes=_vmem_limit_bytes(est)),
        )(x_pad, *weights, *biases)
    else:
        # Parallel batch grid.  Weights/biases: constant index_map (fetched
        # once, VMEM-resident) + Buffered(1) so they are not double-buffered.
        bt = min(batch_tile, max(SUBLANE, _round_up(-(-Bp // 2), SUBLANE)))
        n_tiles = -(-Bp // bt)
        if n_tiles % 2:
            n_tiles += 1          # even tile count -> balanced over v7x's 2 TCs
        Bg = n_tiles * bt
        if Bg != Bp:
            x_pad = jnp.pad(x_pad, ((0, Bg - Bp), (0, 0)))

        param_specs = [
            pl.BlockSpec(a.shape, lambda i: (0, 0), pipeline_mode=pl.Buffered(1))
            for a in weights + biases
        ]
        est = (param_bytes
               + 2 * bt * Kp0 * x_pad.dtype.itemsize     # double-buffered input
               + 2 * bt * Np_last * dtype.itemsize       # double-buffered output
               + bt * max_width * 4 * 3)                 # f32 intermediates
        out_pad = pl.pallas_call(
            kernel,
            out_shape=jax.ShapeDtypeStruct((Bg, Np_last), dtype),
            grid=(n_tiles,),
            in_specs=[pl.BlockSpec((bt, Kp0), lambda i: (i, 0))] + param_specs,
            out_specs=pl.BlockSpec((bt, Np_last), lambda i: (i, 0)),
            compiler_params=pltpu.CompilerParams(
                dimension_semantics=("parallel",),
                vmem_limit_bytes=_vmem_limit_bytes(est)),
        )(x_pad, *weights, *biases)

    return out_pad[:B, :out_size]


# --------------------------------------------------------------------------- #
# Parameter init (mirrors the PyTorch module's shapes)
# --------------------------------------------------------------------------- #
def init_generator_params(key, z_size, out_size, width, depth, dtype=jnp.float32):
    """Returns list of (W, b) with W stored as (in_features, out_features)."""
    if depth > 0:
        dims = [(z_size, width)] + [(width, width)] * (depth - 1) + [(width, out_size)]
    else:
        dims = [(z_size, out_size)]
    params = []
    for fan_in, fan_out in dims:
        key, kw, kb = jax.random.split(key, 3)
        bound = 1.0 / jnp.sqrt(fan_in)  # Kaiming-uniform-like, as in nn.Linear.
        W = jax.random.uniform(kw, (fan_in, fan_out), dtype, -bound, bound)
        b = jax.random.uniform(kb, (fan_out,), dtype, -bound, bound)
        params.append((W, b))
    return params


if __name__ == "__main__":
    # Small shapes consistent with the module: batch=8, z_size=16, width=32,
    # out_size=8, depth=2 -> Linear(16,32)+ReLU, Linear(32,32)+ReLU, Linear(32,8)
    batch, z_size, width, out_size, depth = 8, 16, 32, 8, 2

    key = jax.random.PRNGKey(0)
    key, kz = jax.random.split(key)
    z = jax.random.normal(kz, (batch, z_size), jnp.float32)

    params = init_generator_params(key, z_size, out_size, width, depth)
    # Pack (pad + bf16-cast) once, outside the jit'ed per-call path.
    packed = pack_generator_params(params)

    fwd = jax.jit(functools.partial(generator_forward, out_size=out_size))
    out = jax.block_until_ready(fwd(packed, z))
    assert out.shape == (batch, out_size)

    # Reference 1: exact kernel numerics (bf16 inputs, f32 accumulate/epilogue).
    ref_bf16 = z
    for i, (W, b) in enumerate(params):
        a = ref_bf16.astype(jnp.bfloat16).astype(jnp.float32)
        w = W.astype(jnp.bfloat16).astype(jnp.float32)
        ref_bf16 = a @ w + b
        if i != len(params) - 1:
            ref_bf16 = jnp.maximum(ref_bf16, 0.0)
    assert jnp.allclose(out, ref_bf16, atol=1e-4, rtol=1e-4)

    # Reference 2: full-precision forward pass (semantic fidelity, loose tol
    # because the MXU path uses bf16 operands).
    ref_f32 = z
    for i, (W, b) in enumerate(params):
        ref_f32 = ref_f32 @ W + b
        if i != len(params) - 1:
            ref_f32 = jnp.maximum(ref_f32, 0.0)
    assert jnp.allclose(out, ref_f32, atol=1e-1, rtol=1e-1)

    print("KERNEL_OK")
</pallas_src>

<mosaic_0001>
module attributes {stable_mosaic.version = 11 : i64} {
  func.func @_fused_mlp_kernel(%arg0: memref<8x128xf32, #tpu.memory_space<vmem>>, %arg1: memref<128x128xbf16, #tpu.memory_space<vmem>>, %arg2: memref<128x128xbf16, #tpu.memory_space<vmem>>, %arg3: memref<128x128xbf16, #tpu.memory_space<vmem>>, %arg4: memref<1x128xf32, #tpu.memory_space<vmem>>, %arg5: memref<1x128xf32, #tpu.memory_space<vmem>>, %arg6: memref<1x128xf32, #tpu.memory_space<vmem>>, %arg7: memref<8x128xf32, #tpu.memory_space<vmem>>) attributes {dimension_semantics = [], scalar_prefetch = 0 : i64, scratch_operands = 0 : i64, tpu.core_type = #tpu.core_type<tc>} {
    %c0 = arith.constant 0 : index
    %c0_0 = arith.constant 0 : index
    %0 = vector.load %arg0[%c0, %c0_0] : memref<8x128xf32, #tpu.memory_space<vmem>>, vector<8x128xf32>
    %c0_1 = arith.constant 0 : index
    %c0_2 = arith.constant 0 : index
    %1 = vector.load %arg1[%c0_1, %c0_2] : memref<128x128xbf16, #tpu.memory_space<vmem>>, vector<128x128xbf16>
    %2 = arith.truncf %0 : vector<8x128xf32> to vector<8x128xbf16>
    %cst = arith.constant dense<0.000000e+00> : vector<8x128xf32>
    %3 = tpu.matmul %2, %1, %cst {dimension_numbers = #tpu.dot_dimension_numbers<[1], [0], [0], [1], [0, 0, 1, 1], [], []>} : vector<8x128xbf16>, vector<128x128xbf16>, vector<8x128xf32> -> vector<8x128xf32>
    %c0_3 = arith.constant 0 : index
    %c0_4 = arith.constant 0 : index
    %4 = vector.load %arg4[%c0_3, %c0_4] : memref<1x128xf32, #tpu.memory_space<vmem>>, vector<1x128xf32>
    %5 = vector.broadcast %4 : vector<1x128xf32> to vector<8x128xf32>
    %6 = arith.addf %3, %5 : vector<8x128xf32>
    %cst_5 = arith.constant 0.000000e+00 : f32
    %7 = vector.broadcast %cst_5 : f32 to vector<8x128xf32>
    %8 = arith.maximumf %6, %7 : vector<8x128xf32>
    %c0_6 = arith.constant 0 : index
    %c0_7 = arith.constant 0 : index
    %9 = vector.load %arg2[%c0_6, %c0_7] : memref<128x128xbf16, #tpu.memory_space<vmem>>, vector<128x128xbf16>
    %10 = arith.truncf %8 : vector<8x128xf32> to vector<8x128xbf16>
    %cst_8 = arith.constant dense<0.000000e+00> : vector<8x128xf32>
    %11 = tpu.matmul %10, %9, %cst_8 {dimension_numbers = #tpu.dot_dimension_numbers<[1], [0], [0], [1], [0, 0, 1, 1], [], []>} : vector<8x128xbf16>, vector<128x128xbf16>, vector<8x128xf32> -> vector<8x128xf32>
    %c0_9 = arith.constant 0 : index
    %c0_10 = arith.constant 0 : index
    %12 = vector.load %arg5[%c0_9, %c0_10] : memref<1x128xf32, #tpu.memory_space<vmem>>, vector<1x128xf32>
    %13 = vector.broadcast %12 : vector<1x128xf32> to vector<8x128xf32>
    %14 = arith.addf %11, %13 : vector<8x128xf32>
    %cst_11 = arith.constant 0.000000e+00 : f32
    %15 = vector.broadcast %cst_11 : f32 to vector<8x128xf32>
    %16 = arith.maximumf %14, %15 : vector<8x128xf32>
    %c0_12 = arith.constant 0 : index
    %c0_13 = arith.constant 0 : index
    %17 = vector.load %arg3[%c0_12, %c0_13] : memref<128x128xbf16, #tpu.memory_space<vmem>>, vector<128x128xbf16>
    %18 = arith.truncf %16 : vector<8x128xf32> to vector<8x128xbf16>
    %cst_14 = arith.constant dense<0.000000e+00> : vector<8x128xf32>
    %19 = tpu.matmul %18, %17, %cst_14 {dimension_numbers = #tpu.dot_dimension_numbers<[1], [0], [0], [1], [0, 0, 1, 1], [], []>} : vector<8x128xbf16>, vector<128x128xbf16>, vector<8x128xf32> -> vector<8x128xf32>
    %c0_15 = arith.constant 0 : index
    %c0_16 = arith.constant 0 : index
    %20 = vector.load %arg6[%c0_15, %c0_16] : memref<1x128xf32, #tpu.memory_space<vmem>>, vector<1x128xf32>
    %21 = vector.broadcast %20 : vector<1x128xf32> to vector<8x128xf32>
    %22 = arith.addf %19, %21 : vector<8x128xf32>
    %c0_17 = arith.constant 0 : index
    %c0_18 = arith.constant 0 : index
    %23 = vector.load %arg7[%c0_17, %c0_18] : memref<8x128xf32, #tpu.memory_space<vmem>>, vector<8x128xf32>
    tpu.vector_store %arg7[%c0_17, %c0_18], %22 {strides = array<i32>} : memref<8x128xf32, #tpu.memory_space<vmem>>, vector<8x128xf32>,
    return
  }
}

</mosaic_0001>

<llo_original>
// kernel: generator_forward.1
$region0: #{generator_forward.1}
  #allocation0 [shape = 'u32[]', space=smem, size = 0x4, offset = 0x4, fixed_abs, tag = 'smem constant byte address 0x4 - core index']
  #allocation1 [shape = 'u32[72,128]{1,0:T(1,128)}', space=vmem, size = 0x9000, scoped, tag = 'internal scratch']
  %s0 = inlined_call_operand.vmem [shape: f32[8,128], index: 0, kind: input, shape index: {}]
  %s1 = inlined_call_operand.hbm [shape: bf16[128,128], index: 1, kind: input, shape index: {}]
  %s2 = inlined_call_operand.hbm [shape: bf16[128,128], index: 2, kind: input, shape index: {}]
  %s3 = inlined_call_operand.hbm [shape: bf16[128,128], index: 3, kind: input, shape index: {}]
  %s4 = inlined_call_operand.vmem [shape: f32[1,128], index: 4, kind: input, shape index: {}]
  %s5 = inlined_call_operand.vmem [shape: f32[1,128], index: 5, kind: input, shape index: {}]
  %s6 = inlined_call_operand.vmem [shape: f32[1,128], index: 6, kind: input, shape index: {}]
  %s7 = inlined_call_operand.hbm [shape: f32[8,128], index: 7, kind: output, shape index: {}]
  %s8 = sld [smem:[#allocation0]]
  $region50: #{generator_forward.1} parent=0
    _
  %s10 = ssub.s32 1, %s8
  %s11 = scalar_select 0, %s10, %s8
  $region1: #{generator_forward.1} parent=0
    #allocation2 [shape = 'u8[32768]{0}', space=vmem, size = 0x8000, scoped, tag = 'input window, operand 1, single buffered']
    #allocation3 [shape = 's32[1]{0}', space=sflag, size = 0x4, scoped, tag = 'scoped memory for generator_forward.1']
    #allocation4 [shape = 's32[1]{0}', space=sflag, size = 0x4, scoped, tag = 'scoped memory for generator_forward.1']
    #allocation5 [shape = 'u8[32768]{0}', space=vmem, size = 0x8000, scoped, tag = 'input window, operand 2, single buffered']
    #allocation6 [shape = 's32[1]{0}', space=sflag, size = 0x4, scoped, tag = 'scoped memory for generator_forward.1']
    #allocation7 [shape = 'u8[32768]{0}', space=vmem, size = 0x8000, scoped, tag = 'input window, operand 3, single buffered']
    #allocation8 [shape = 'u8[4096]{0}', space=vmem, size = 0x1000, scoped, tag = 'output window, operand 0, single buffered']
    %12 = vsyncpa [#allocation3], 0
    %13 = vsyncpa [#allocation6], 0
    %14 = vsyncpa [#allocation4], 0
    // Predicated region
    $region2: #{generator_forward.1} parent=1 // pred_check
      _
    $region3: #{generator_forward.1} parent=1 // pred_check_branch
      %16 = sbr.rel (0) target = $region5
    $region4: #{generator_forward.1} parent=1 // pred_region
      _
    $region5: #{generator_forward.1} parent=1 // pred_fallthru
      _
    // Predicated region
    $region6: #{generator_forward.1} parent=1 // pred_check
      _
    $region7: #{generator_forward.1} parent=1 // pred_check_branch
      %18 = sbr.rel (0) target = $region9
    $region8: #{generator_forward.1} parent=1 // pred_region
      %20 = vsyncadd [#allocation3], 0
      %s21 = sshll.u32 %s1, 4
      %s22 = int_to_ptr.hbm [resolvable:$true] %s21
      %s23 = sshll.u32 [#allocation2], 4
      %s24 = int_to_ptr.vmem [resolvable:$true] %s23
      %29 = dma.hbm_to_vmem [thread:$0]  %s22, 1024, %s24, [#allocation3], 64, 64, 4
    $region9: #{generator_forward.1} parent=1 // pred_fallthru
      _
    // Predicated region
    $region10: #{generator_forward.1} parent=1 // pred_check
      _
    $region11: #{generator_forward.1} parent=1 // pred_check_branch
      %31 = sbr.rel (0) target = $region13
    $region12: #{generator_forward.1} parent=1 // pred_region
      %33 = vsyncadd [#allocation6], 0
      %s34 = sshll.u32 %s2, 4
      %s35 = int_to_ptr.hbm [resolvable:$true] %s34
      %s36 = sshll.u32 [#allocation5], 4
      %s37 = int_to_ptr.vmem [resolvable:$true] %s36
      %42 = dma.hbm_to_vmem [thread:$0]  %s35, 1024, %s37, [#allocation6], 64, 64, 4
    $region13: #{generator_forward.1} parent=1 // pred_fallthru
      _
    // Predicated region
    $region14: #{generator_forward.1} parent=1 // pred_check
      _
    $region15: #{generator_forward.1} parent=1 // pred_check_branch
      %44 = sbr.rel (0) target = $region17
    $region16: #{generator_forward.1} parent=1 // pred_region
      %46 = vsyncadd [#allocation6], 0
      %s47 = sshll.u32 %s3, 4
      %s48 = int_to_ptr.hbm [resolvable:$true] %s47
      %s49 = sshll.u32 [#allocation7], 4
      %s50 = int_to_ptr.vmem [resolvable:$true] %s49
      %55 = dma.hbm_to_vmem [thread:$0]  %s48, 1024, %s50, [#allocation6], 64, 64, 4
    $region17: #{generator_forward.1} parent=1 // pred_fallthru
      _
    // Predicated region
    $region18: #{generator_forward.1} parent=1 // pred_check
      _
    $region19: #{generator_forward.1} parent=1 // pred_check_branch
      %57 = sbr.rel (0) target = $region21
    $region20: #{generator_forward.1} parent=1 // pred_region
      _
    $region21: #{generator_forward.1} parent=1 // pred_fallthru
      _
    // Predicated region
    $region22: #{generator_forward.1} parent=1 // pred_check
      _
    $region23: #{generator_forward.1} parent=1 // pred_check_branch
      %59 = sbr.rel (0) target = $region25
    $region24: #{generator_forward.1} parent=1 // pred_region
      _
    $region25: #{generator_forward.1} parent=1 // pred_fallthru
      _
    // Predicated region
    $region26: #{generator_forward.1} parent=1 // pred_check
      _
    $region27: #{generator_forward.1} parent=1 // pred_check_branch
      %61 = sbr.rel (0) target = $region29
    $region28: #{generator_forward.1} parent=1 // pred_region
      _
    $region29: #{generator_forward.1} parent=1 // pred_fallthru
      _
    // Predicated region
    $region30: #{generator_forward.1} parent=1 // pred_check
      _
    $region31: #{generator_forward.1} parent=1 // pred_check_branch
      %63 = sbr.rel (0) target = $region33
    $region32: #{generator_forward.1} parent=1 // pred_region
      %65 = dma.done [#allocation3], 1024
    $region33: #{generator_forward.1} parent=1 // pred_fallthru
      _
    // Predicated region
    $region34: #{generator_forward.1} parent=1 // pred_check
      _
    $region35: #{generator_forward.1} parent=1 // pred_check_branch
      %67 = sbr.rel (0) target = $region37
    $region36: #{generator_forward.1} parent=1 // pred_region
      %69 = dma.done [#allocation6], 1024
    $region37: #{generator_forward.1} parent=1 // pred_fallthru
      _
    // Predicated region
    $region38: #{generator_forward.1} parent=1 // pred_check
      _
    $region39: #{generator_forward.1} parent=1 // pred_check_branch
      %71 = sbr.rel (0) target = $region41
    $region40: #{generator_forward.1} parent=1 // pred_region
      %73 = dma.done [#allocation6], 1024
    $region41: #{generator_forward.1} parent=1 // pred_fallthru
      _
    %v74 = vld [vmem:[%s0] sm:$0xff]
    %v75 = vld [vmem:[#allocation2] sm:$0xf]
    %v76 = vld [vmem:[#allocation2 + $0x4] sm:$0xf]
    %v77 = vld [vmem:[#allocation2 + $0x8] sm:$0xf]
    %v78 = vld [vmem:[#allocation2 + $0xc] sm:$0xf]
    %v79 = vld [vmem:[#allocation2 + $0x10] sm:$0xf]
    %v80 = vld [vmem:[#allocation2 + $0x14] sm:$0xf]
    %v81 = vld [vmem:[#allocation2 + $0x18] sm:$0xf]
    %v82 = vld [vmem:[#allocation2 + $0x1c] sm:$0xf]
    %v83 = vld [vmem:[#allocation2 + $0x20] sm:$0xf]
    %v84 = vld [vmem:[#allocation2 + $0x24] sm:$0xf]
    %v85 = vld [vmem:[#allocation2 + $0x28] sm:$0xf]
    %v86 = vld [vmem:[#allocation2 + $0x2c] sm:$0xf]
    %v87 = vld [vmem:[#allocation2 + $0x30] sm:$0xf]
    %v88 = vld [vmem:[#allocation2 + $0x34] sm:$0xf]
    %v89 = vld [vmem:[#allocation2 + $0x38] sm:$0xf]
    %v90 = vld [vmem:[#allocation2 + $0x3c] sm:$0xf]
    %v91 = vpack.c.bf16 %v74, %v74
    %v92 = vld [vmem:[%s4] sm:$0x1]
    %v94 = vperm.slane %v92, 0
    %v112 = vunpack.c.l.b16 %v75
    %v113 = vunpack.c.l.b16 %v76
    %v114 = vunpack.c.l.b16 %v77
    %v115 = vunpack.c.l.b16 %v78
    %v116 = vunpack.c.l.b16 %v79
    %v117 = vunpack.c.l.b16 %v80
    %v118 = vunpack.c.l.b16 %v81
    %v119 = vunpack.c.l.b16 %v82
    %v120 = vunpack.c.l.b16 %v83
    %v121 = vunpack.c.l.b16 %v84
    %v122 = vunpack.c.l.b16 %v85
    %v123 = vunpack.c.l.b16 %v86
    %v124 = vunpack.c.l.b16 %v87
    %v125 = vunpack.c.l.b16 %v88
    %v126 = vunpack.c.l.b16 %v89
    %v127 = vunpack.c.l.b16 %v90
    %v128 = vpack.c.b16 %v113, %v112
    %v129 = vpack.c.b16 %v115, %v114
    %v130 = vpack.c.b16 %v117, %v116
    %v131 = vpack.c.b16 %v119, %v118
    %v132 = vpack.c.b16 %v121, %v120
    %v133 = vpack.c.b16 %v123, %v122
    %v134 = vpack.c.b16 %v125, %v124
    %v135 = vpack.c.b16 %v127, %v126
    %144 = vmatpush.bf16.msra.mxu0 %v135
    %145 = vmatpush.bf16.msra.mxu0 %v134
    %146 = vmatpush.bf16.msra.mxu0 %v133
    %147 = vmatpush.bf16.msra.mxu0 %v132
    %148 = vmatpush.bf16.msra.mxu0 %v131
    %149 = vmatpush.bf16.msra.mxu0 %v130
    %150 = vmatpush.bf16.msra.mxu0 %v129
    %151 = vmatpush.bf16.msra.mxu0 %v128
    %152 = vmatmul.bf16.gmra.mxu0 %v91
    %v153 = vpop.f32.mrf.mxu0
    %v154 = vadd.f32 %v94, %v153
    %v155 = vpop.f32.mrf.mxu0
    %156 = vdwg.mxu0
    %v157 = vmax.f32 %v154, 0.0
    %v158 = vld [vmem:[#allocation5] sm:$0xf]
    %v159 = vld [vmem:[#allocation5 + $0x4] sm:$0xf]
    %v160 = vld [vmem:[#allocation5 + $0x8] sm:$0xf]
    %v161 = vld [vmem:[#allocation5 + $0xc] sm:$0xf]
    %v162 = vld [vmem:[#allocation5 + $0x10] sm:$0xf]
    %v163 = vld [vmem:[#allocation5 + $0x14] sm:$0xf]
    %v164 = vld [vmem:[#allocation5 + $0x18] sm:$0xf]
    %v165 = vld [vmem:[#allocation5 + $0x1c] sm:$0xf]
    %v166 = vld [vmem:[#allocation5 + $0x20] sm:$0xf]
    %v167 = vld [vmem:[#allocation5 + $0x24] sm:$0xf]
    %v168 = vld [vmem:[#allocation5 + $0x28] sm:$0xf]
    %v169 = vld [vmem:[#allocation5 + $0x2c] sm:$0xf]
    %v170 = vld [vmem:[#allocation5 + $0x30] sm:$0xf]
    %v171 = vld [vmem:[#allocation5 + $0x34] sm:$0xf]
    %v172 = vld [vmem:[#allocation5 + $0x38] sm:$0xf]
    %v173 = vld [vmem:[#allocation5 + $0x3c] sm:$0xf]
    %v174 = vpack.c.bf16 %v157, %v157
    %v175 = vld [vmem:[%s5] sm:$0x1]
    %v177 = vperm.slane %v175, 0
    %v195 = vunpack.c.l.b16 %v158
    %v196 = vunpack.c.l.b16 %v159
    %v197 = vunpack.c.l.b16 %v160
    %v198 = vunpack.c.l.b16 %v161
    %v199 = vunpack.c.l.b16 %v162
    %v200 = vunpack.c.l.b16 %v163
    %v201 = vunpack.c.l.b16 %v164
    %v202 = vunpack.c.l.b16 %v165
    %v203 = vunpack.c.l.b16 %v166
    %v204 = vunpack.c.l.b16 %v167
    %v205 = vunpack.c.l.b16 %v168
    %v206 = vunpack.c.l.b16 %v169
    %v207 = vunpack.c.l.b16 %v170
    %v208 = vunpack.c.l.b16 %v171
    %v209 = vunpack.c.l.b16 %v172
    %v210 = vunpack.c.l.b16 %v173
    %v211 = vpack.c.b16 %v196, %v195
    %v212 = vpack.c.b16 %v198, %v197
    %v213 = vpack.c.b16 %v200, %v199
    %v214 = vpack.c.b16 %v202, %v201
    %v215 = vpack.c.b16 %v204, %v203
    %v216 = vpack.c.b16 %v206, %v205
    %v217 = vpack.c.b16 %v208, %v207
    %v218 = vpack.c.b16 %v210, %v209
    %227 = vmatpush.bf16.msra.mxu0 %v218
    %228 = vmatpush.bf16.msra.mxu0 %v217
    %229 = vmatpush.bf16.msra.mxu0 %v216
    %230 = vmatpush.bf16.msra.mxu0 %v215
    %231 = vmatpush.bf16.msra.mxu0 %v214
    %232 = vmatpush.bf16.msra.mxu0 %v213
    %233 = vmatpush.bf16.msra.mxu0 %v212
    %234 = vmatpush.bf16.msra.mxu0 %v211
    %235 = vmatmul.bf16.gmra.mxu0 %v174
    %v236 = vpop.f32.mrf.mxu0
    %v237 = vadd.f32 %v177, %v236
    %v238 = vpop.f32.mrf.mxu0
    %239 = vdwg.mxu0
    %v240 = vmax.f32 %v237, 0.0
    %v241 = vld [vmem:[#allocation7] sm:$0xf]
    %v242 = vld [vmem:[#allocation7 + $0x4] sm:$0xf]
    %v243 = vld [vmem:[#allocation7 + $0x8] sm:$0xf]
    %v244 = vld [vmem:[#allocation7 + $0xc] sm:$0xf]
    %v245 = vld [vmem:[#allocation7 + $0x10] sm:$0xf]
    %v246 = vld [vmem:[#allocation7 + $0x14] sm:$0xf]
    %v247 = vld [vmem:[#allocation7 + $0x18] sm:$0xf]
    %v248 = vld [vmem:[#allocation7 + $0x1c] sm:$0xf]
    %v249 = vld [vmem:[#allocation7 + $0x20] sm:$0xf]
    %v250 = vld [vmem:[#allocation7 + $0x24] sm:$0xf]
    %v251 = vld [vmem:[#allocation7 + $0x28] sm:$0xf]
    %v252 = vld [vmem:[#allocation7 + $0x2c] sm:$0xf]
    %v253 = vld [vmem:[#allocation7 + $0x30] sm:$0xf]
    %v254 = vld [vmem:[#allocation7 + $0x34] sm:$0xf]
    %v255 = vld [vmem:[#allocation7 + $0x38] sm:$0xf]
    %v256 = vld [vmem:[#allocation7 + $0x3c] sm:$0xf]
    %v257 = vpack.c.bf16 %v240, %v240
    %v258 = vld [vmem:[%s6] sm:$0x1]
    %v260 = vperm.slane %v258, 0
    %v278 = vunpack.c.l.b16 %v241
    %v279 = vunpack.c.l.b16 %v242
    %v280 = vunpack.c.l.b16 %v243
    %v281 = vunpack.c.l.b16 %v244
    %v282 = vunpack.c.l.b16 %v245
    %v283 = vunpack.c.l.b16 %v246
    %v284 = vunpack.c.l.b16 %v247
    %v285 = vunpack.c.l.b16 %v248
    %v286 = vunpack.c.l.b16 %v249
    %v287 = vunpack.c.l.b16 %v250
    %v288 = vunpack.c.l.b16 %v251
    %v289 = vunpack.c.l.b16 %v252
    %v290 = vunpack.c.l.b16 %v253
    %v291 = vunpack.c.l.b16 %v254
    %v292 = vunpack.c.l.b16 %v255
    %v293 = vunpack.c.l.b16 %v256
    %v294 = vpack.c.b16 %v279, %v278
    %v295 = vpack.c.b16 %v281, %v280
    %v296 = vpack.c.b16 %v283, %v282
    %v297 = vpack.c.b16 %v285, %v284
    %v298 = vpack.c.b16 %v287, %v286
    %v299 = vpack.c.b16 %v289, %v288
    %v300 = vpack.c.b16 %v291, %v290
    %v301 = vpack.c.b16 %v293, %v292
    %310 = vmatpush.bf16.msra.mxu0 %v301
    %311 = vmatpush.bf16.msra.mxu0 %v300
    %312 = vmatpush.bf16.msra.mxu0 %v299
    %313 = vmatpush.bf16.msra.mxu0 %v298
    %314 = vmatpush.bf16.msra.mxu0 %v297
    %315 = vmatpush.bf16.msra.mxu0 %v296
    %316 = vmatpush.bf16.msra.mxu0 %v295
    %317 = vmatpush.bf16.msra.mxu0 %v294
    %318 = vmatmul.bf16.gmra.mxu0 %v257
    %v319 = vpop.f32.mrf.mxu0
    %v320 = vadd.f32 %v260, %v319
    %v321 = vpop.f32.mrf.mxu0
    %322 = vdwg.mxu0
    %323 = vst [vmem:[#allocation8] sm:$0xff] %v320
    // Predicated region
    $region42: #{generator_forward.1} parent=1 // pred_check
      _
    $region43: #{generator_forward.1} parent=1 // pred_check_branch
      %325 = sbr.rel (0) target = $region45
    $region44: #{generator_forward.1} parent=1 // pred_region
      %327 = vsyncadd [#allocation4], 0
      %s329 = sshll.u32 [#allocation8], 4
      %s330 = int_to_ptr.vmem [resolvable:$true] %s329
      %s331 = sshll.u32 %s7, 4
      %s332 = int_to_ptr.hbm [resolvable:$true] %s331
      %334 = dma.vmem_to_hbm [thread:$0]  %s330, 128, %s332, [#allocation4]
    $region45: #{generator_forward.1} parent=1 // pred_fallthru
      _
    // Predicated region
    $region46: #{generator_forward.1} parent=1 // pred_check
      _
    $region47: #{generator_forward.1} parent=1 // pred_check_branch
      %336 = sbr.rel (0) target = $region49
    $region48: #{generator_forward.1} parent=1 // pred_region
      %338 = dma.done [#allocation4], 128
    $region49: #{generator_forward.1} parent=1 // pred_fallthru
      _
    %339 = vsyncpa [#allocation3], 1
    %340 = vsyncpa [#allocation6], 1
    %341 = vsyncpa [#allocation4], 1

</llo_original>
